<compile_context>
chip_gen: v7x
topology: tpu7x:2x2x1
jax: 0.10.0
libtpu: 0.0.40
codegen_flags: <defaults>
</compile_context>

<pallas_src>
import functools

import jax
import jax.numpy as jnp
from jax.experimental import pallas as pl
from jax.experimental.pallas import tpu as pltpu


def _tree_sum(chunks):
    """Pairwise (tree) sum of a static list of equal-shape arrays (pure VPU)."""
    while len(chunks) > 1:
        nxt = [chunks[i] + chunks[i + 1] for i in range(0, len(chunks) - 1, 2)]
        if len(chunks) % 2:
            nxt.append(chunks[-1])
        chunks = nxt
    return chunks[0]


def _se_weight_kernel(x_ref, w1t_ref, b1_ref, w2t_ref, b2_ref, o_ref, acc_ref,
                      *, total_hw, tail, acc_lanes, need_mask):
    # x_ref:  (TN, C, THW)   w1t_ref: (C, Cr)   b1_ref: (1, Cr)
    # w2t_ref:(Cr, C)        b2_ref:  (1, C)    o_ref:  (TN, 1, C)
    # acc_ref:(TN, C, acc_lanes) f32 lane-folded partial sums (persists across
    # HW steps of one batch tile).
    hw_id = pl.program_id(1)
    n_hw = pl.num_programs(1)
    thw = x_ref.shape[-1]
    n_chunks = thw // acc_lanes          # static python int

    def load_chunk(i):
        # Lane-aligned 128-wide (or full-width) column subview: free, no XLU.
        return x_ref[:, :, i * acc_lanes:(i + 1) * acc_lanes].astype(jnp.float32)

    def accumulate(folded):
        # First HW step writes directly (no zero-init pass), later steps RMW.
        @pl.when(hw_id == 0)
        def _():
            acc_ref[...] = folded

        @pl.when(hw_id > 0)
        def _():
            acc_ref[...] += folded

    if not need_mask:
        accumulate(_tree_sum([load_chunk(i) for i in range(n_chunks)]))
    else:
        # Only the LAST HW tile can read past H*W; all earlier steps take the
        # mask-free path.
        @pl.when(hw_id < n_hw - 1)
        def _():
            accumulate(_tree_sum([load_chunk(i) for i in range(n_chunks)]))

        @pl.when(hw_id == n_hw - 1)
        def _():
            # `tail` valid lanes remain in this tile (static python int).
            n_full = tail // acc_lanes
            rem = tail - n_full * acc_lanes
            chunks = [load_chunk(i) for i in range(n_full)]
            if rem:
                c = load_chunk(n_full)
                lane = jax.lax.broadcasted_iota(jnp.int32, c.shape, 2)
                chunks.append(jnp.where(lane < rem, c, 0.0))
            # Chunks entirely past the boundary are skipped.
            # need_mask => n_hw >= 2, so this is never the first HW step.
            acc_ref[...] += _tree_sum(chunks)

    @pl.when(hw_id == n_hw - 1)
    def _finalize():
        # Single cross-lane reduce + exact mean over the true spatial size.
        pooled = jnp.sum(acc_ref[...], axis=-1) * (1.0 / float(total_hw))  # (TN, C)

        # fc1 (1x1 conv C -> Cr); weights pre-transposed in the wrapper.
        h = jnp.dot(pooled, w1t_ref[...].astype(jnp.float32),
                    preferred_element_type=jnp.float32)                   # (TN, Cr)
        h = jnp.maximum(h + b1_ref[...].astype(jnp.float32), 0.0)

        # fc2 (1x1 conv Cr -> C) + sigmoid.
        out = jnp.dot(h, w2t_ref[...].astype(jnp.float32),
                      preferred_element_type=jnp.float32)                 # (TN, C)
        out = jax.nn.sigmoid(out + b2_ref[...].astype(jnp.float32))

        o_ref[...] = out[:, None, :].astype(o_ref.dtype)                  # (TN,1,C)


def _pick_tiles(n, c, total_hw, itemsize, max_hw_tile, vmem_cap):
    """Choose (tn, thw) for the x block from the generation's VMEM capacity."""
    headroom = 8 << 20          # compiler scratch / accumulator / constants
    per_tile_cap = 16 << 20     # ~roofline knee; fits 2x buffers on every gen

    def thw_budget(tn_):
        budget = min(per_tile_cap, max(1 << 20, (vmem_cap - headroom) // 2))
        t = budget // (tn_ * c * itemsize)
        return max(128, (t // 128) * 128)

    tn = n if n <= 8 else 8
    # Protect per-(n,c)-row DMA run length: shrink the batch tile (down to 1)
    # before letting the lane tile drop below 512 lanes (large-C SE blocks).
    while tn > 1 and thw_budget(tn) < 512:
        tn = max(1, tn // 2)

    thw = min(thw_budget(tn), max(128, (max_hw_tile // 128) * 128))
    if total_hw <= thw:
        thw = total_hw          # single block == full axis (layout rule OK)
    return tn, thw


def se_weight_module(x, w1, b1, w2, b2, *, max_hw_tile=4096):
    """x: (N, C, H, W) NCHW.  Returns (N, C, 1, 1) like the PyTorch module.

    w1: (Cr, C), b1: (Cr,), w2: (C, Cr), b2: (C,)  (1x1 convs squeezed to 2D).
    Works for f32 or bf16 x (accumulation is always f32).
    """
    N, C, H, W = x.shape
    Cr = w1.shape[0]
    total_hw = H * W
    itemsize = jnp.dtype(x.dtype).itemsize

    x_flat = x.reshape(N, C, total_hw)
    # Pre-transpose weights once in the wrapper -> no in-kernel transpose.
    w1t = jnp.asarray(w1).reshape(Cr, C).T          # (C, Cr)
    w2t = jnp.asarray(w2).reshape(C, Cr).T          # (Cr, C)
    b1_2d = jnp.asarray(b1).reshape(1, Cr)
    b2_2d = jnp.asarray(b2).reshape(1, C)

    # Generation-aware VMEM capacity (v5e/v6e: 128 MiB, v7x: 64 MiB per TC).
    try:
        vmem_cap = int(pltpu.get_tpu_info().vmem_capacity_bytes)
    except Exception:
        vmem_cap = 64 << 20      # conservative fallback
    vmem_cap = int(min(max(vmem_cap, 32 << 20), 128 << 20))

    tn, thw = _pick_tiles(N, C, total_hw, itemsize, max_hw_tile, vmem_cap)
    grid_n = pl.cdiv(N, tn)
    grid_hw = pl.cdiv(total_hw, thw)
    need_mask = (total_hw % thw) != 0
    tail = total_hw - (grid_hw - 1) * thw            # valid lanes in last tile
    acc_lanes = 128 if thw % 128 == 0 else thw       # lane-folded accumulator

    # VMEM budget: double-buffered x tiles + narrow f32 accumulator + small
    # (double-buffered) constants and output, plus slack.
    x_tile_bytes = tn * C * thw * itemsize
    acc_bytes = tn * C * acc_lanes * 4
    const_bytes = (C * Cr + Cr + Cr * C + C) * 4
    out_bytes = tn * C * itemsize
    vmem_need = (2 * x_tile_bytes + acc_bytes + 2 * const_bytes
                 + 2 * out_bytes + (2 << 20))
    hard_cap = max(16 << 20, vmem_cap - (4 << 20))
    vmem_limit = int(min(max(vmem_need, 16 << 20), hard_cap))

    # Advisory cost: this is an HBM-bandwidth-bound reader of x.
    cost = pl.CostEstimate(
        flops=N * C * total_hw + 4 * N * C * Cr,
        transcendentals=N * C,
        bytes_accessed=(x_flat.size * itemsize
                        + (C * Cr + Cr + Cr * C + C) * 4
                        + N * C * itemsize),
    )

    kernel = functools.partial(_se_weight_kernel,
                               total_hw=total_hw, tail=tail,
                               acc_lanes=acc_lanes, need_mask=need_mask)

    out = pl.pallas_call(
        kernel,
        out_shape=jax.ShapeDtypeStruct((N, 1, C), x.dtype),
        grid_spec=pltpu.PrefetchScalarGridSpec(
            num_scalar_prefetch=0,
            grid=(grid_n, grid_hw),
            in_specs=[
                pl.BlockSpec((tn, C, thw), lambda n, hw: (n, 0, hw)),
                pl.BlockSpec((C, Cr), lambda n, hw: (0, 0)),
                pl.BlockSpec((1, Cr), lambda n, hw: (0, 0)),
                pl.BlockSpec((Cr, C), lambda n, hw: (0, 0)),
                pl.BlockSpec((1, C), lambda n, hw: (0, 0)),
            ],
            out_specs=pl.BlockSpec((tn, 1, C), lambda n, hw: (n, 0, 0)),
            scratch_shapes=[pltpu.VMEM((tn, C, acc_lanes), jnp.float32)],
        ),
        compiler_params=pltpu.CompilerParams(
            dimension_semantics=("parallel", "arbitrary"),
            vmem_limit_bytes=vmem_limit,
        ),
        cost_estimate=cost,
    )(x_flat, w1t, b1_2d, w2t, b2_2d)

    return out.reshape(N, C, 1, 1)


def _reference(x, w1, b1, w2, b2):
    # Pure-JAX reference of the PyTorch forward (NCHW).
    pooled = jnp.mean(x.astype(jnp.float32), axis=(2, 3))   # (N, C)
    h = jnp.maximum(pooled @ w1.T + b1, 0.0)                # (N, Cr)
    out = jax.nn.sigmoid(h @ w2.T + b2)                     # (N, C)
    return out[:, :, None, None]


if __name__ == "__main__":
    # Small shapes consistent with the module: reduction=16 needs C >= 16.
    N, C, H, W = 2, 64, 16, 16
    reduction = 16
    Cr = C // reduction

    key = jax.random.PRNGKey(0)
    kx, k1, k2, k3, k4 = jax.random.split(key, 5)

    x = jax.random.normal(kx, (N, C, H, W), dtype=jnp.float32)
    # Deterministic synthetic parameters (Conv2d 1x1 weights squeezed to 2D).
    w1 = 0.1 * jax.random.normal(k1, (Cr, C), dtype=jnp.float32)
    b1 = 0.1 * jax.random.normal(k2, (Cr,), dtype=jnp.float32)
    w2 = 0.1 * jax.random.normal(k3, (C, Cr), dtype=jnp.float32)
    b2 = 0.1 * jax.random.normal(k4, (C,), dtype=jnp.float32)

    # 1) max_hw_tile=128 forces 2 HW grid steps -> exercises the accumulator.
    out = se_weight_module(x, w1, b1, w2, b2, max_hw_tile=128)
    jax.block_until_ready(out)
    ref = _reference(x, w1, b1, w2, b2)
    assert out.shape == (N, C, 1, 1)
    assert jnp.allclose(out, ref, atol=1e-5, rtol=1e-5)

    # 2) Ragged spatial size (13*13 = 169) exercises the masked last HW tile.
    x2 = jax.random.normal(kx, (N, C, 13, 13), dtype=jnp.float32)
    out2 = se_weight_module(x2, w1, b1, w2, b2, max_hw_tile=128)
    jax.block_until_ready(out2)
    ref2 = _reference(x2, w1, b1, w2, b2)
    assert jnp.allclose(out2, ref2, atol=1e-5, rtol=1e-5)

    # 3) Default tiling: single HW block, multi-chunk lane fold in one step.
    out3 = se_weight_module(x, w1, b1, w2, b2)
    jax.block_until_ready(out3)
    assert jnp.allclose(out3, ref, atol=1e-5, rtol=1e-5)

    print("KERNEL_OK")
</pallas_src>

<mosaic_0001>
module attributes {stable_mosaic.version = 11 : i64} {
  func.func @_se_weight_kernel(%arg0: i32, %arg1: i32, %arg2: memref<2x64x128xf32, #tpu.memory_space<vmem>>, %arg3: memref<64x4xf32, #tpu.memory_space<vmem>>, %arg4: memref<1x4xf32, #tpu.memory_space<vmem>>, %arg5: memref<4x64xf32, #tpu.memory_space<vmem>>, %arg6: memref<1x64xf32, #tpu.memory_space<vmem>>, %arg7: memref<2x1x64xf32, #tpu.memory_space<vmem>>, %arg8: memref<2x64x128xf32, #tpu.memory_space<vmem>>) attributes {dimension_semantics = [#tpu.dimension_semantics<parallel>, #tpu.dimension_semantics<arbitrary>], iteration_bounds = array<i64: 1, 2>, scalar_prefetch = 0 : i64, scratch_operands = 1 : i64, tpu.core_type = #tpu.core_type<tc>, window_params = [{transform_indices = @transform_0, window_bounds = array<i64: 2, 64, 128>}, {pipeline_mode = #tpu.pipeline_mode<synchronous>, transform_indices = @transform_1, window_bounds = array<i64: 64, 4>}, {pipeline_mode = #tpu.pipeline_mode<synchronous>, transform_indices = @transform_2, window_bounds = array<i64: 1, 4>}, {pipeline_mode = #tpu.pipeline_mode<synchronous>, transform_indices = @transform_3, window_bounds = array<i64: 4, 64>}, {pipeline_mode = #tpu.pipeline_mode<synchronous>, transform_indices = @transform_4, window_bounds = array<i64: 1, 64>}, {transform_indices = @transform_5, window_bounds = array<i64: 2, 1, 64>}]} {
    %c0 = arith.constant 0 : index
    %c0_0 = arith.constant 0 : index
    %c0_1 = arith.constant 0 : index
    %0 = vector.load %arg2[%c0, %c0_0, %c0_1] : memref<2x64x128xf32, #tpu.memory_space<vmem>>, vector<2x64x128xf32>
    %c0_i32 = arith.constant 0 : i32
    %1 = arith.cmpi eq, %arg1, %c0_i32 : i32
    %2 = arith.extui %1 : i1 to i32
    %c0_i32_2 = arith.constant 0 : i32
    %3 = arith.cmpi ne, %2, %c0_i32_2 : i32
    scf.if %3 {
      %c0_6 = arith.constant 0 : index
      %c0_7 = arith.constant 0 : index
      %c0_8 = arith.constant 0 : index
      %10 = vector.load %arg8[%c0_6, %c0_7, %c0_8] : memref<2x64x128xf32, #tpu.memory_space<vmem>>, vector<2x64x128xf32>
      tpu.vector_store %arg8[%c0_6, %c0_7, %c0_8], %0 {strides = array<i32>} : memref<2x64x128xf32, #tpu.memory_space<vmem>>, vector<2x64x128xf32>,
    } else {
    }
    %c0_i32_3 = arith.constant 0 : i32
    %4 = arith.cmpi sgt, %arg1, %c0_i32_3 : i32
    %5 = arith.extui %4 : i1 to i32
    %c0_i32_4 = arith.constant 0 : i32
    %6 = arith.cmpi ne, %5, %c0_i32_4 : i32
    scf.if %6 {
      %c0_6 = arith.constant 0 : index
      %c0_7 = arith.constant 0 : index
      %c0_8 = arith.constant 0 : index
      %10 = vector.load %arg8[%c0_6, %c0_7, %c0_8] : memref<2x64x128xf32, #tpu.memory_space<vmem>>, vector<2x64x128xf32>
      %11 = arith.addf %10, %0 : vector<2x64x128xf32>
      %c0_9 = arith.constant 0 : index
      %c0_10 = arith.constant 0 : index
      %c0_11 = arith.constant 0 : index
      %12 = vector.load %arg8[%c0_9, %c0_10, %c0_11] : memref<2x64x128xf32, #tpu.memory_space<vmem>>, vector<2x64x128xf32>
      tpu.vector_store %arg8[%c0_9, %c0_10, %c0_11], %11 {strides = array<i32>} : memref<2x64x128xf32, #tpu.memory_space<vmem>>, vector<2x64x128xf32>,
    } else {
    }
    %c1_i32 = arith.constant 1 : i32
    %7 = arith.cmpi eq, %arg1, %c1_i32 : i32
    %8 = arith.extui %7 : i1 to i32
    %c0_i32_5 = arith.constant 0 : i32
    %9 = arith.cmpi ne, %8, %c0_i32_5 : i32
    scf.if %9 {
      %c0_6 = arith.constant 0 : index
      %c0_7 = arith.constant 0 : index
      %c0_8 = arith.constant 0 : index
      %10 = vector.load %arg8[%c0_6, %c0_7, %c0_8] : memref<2x64x128xf32, #tpu.memory_space<vmem>>, vector<2x64x128xf32>
      %cst = arith.constant dense<0.000000e+00> : vector<2x64xf32>
      %11 = vector.multi_reduction <add>, %10, %cst [2] : vector<2x64x128xf32> to vector<2x64xf32>
      %cst_9 = arith.constant 3.906250e-03 : f32
      %12 = vector.broadcast %cst_9 : f32 to vector<2x64xf32>
      %13 = arith.mulf %11, %12 : vector<2x64xf32>
      %c0_10 = arith.constant 0 : index
      %c0_11 = arith.constant 0 : index
      %14 = vector.load %arg3[%c0_10, %c0_11] : memref<64x4xf32, #tpu.memory_space<vmem>>, vector<64x4xf32>
      %cst_12 = arith.constant dense<0.000000e+00> : vector<2x4xf32>
      %15 = tpu.matmul %13, %14, %cst_12 {dimension_numbers = #tpu.dot_dimension_numbers<[1], [0], [0], [1], [0, 0, 1, 1], [], []>} : vector<2x64xf32>, vector<64x4xf32>, vector<2x4xf32> -> vector<2x4xf32>
      %c0_13 = arith.constant 0 : index
      %c0_14 = arith.constant 0 : index
      %16 = vector.load %arg4[%c0_13, %c0_14] : memref<1x4xf32, #tpu.memory_space<vmem>>, vector<1x4xf32>
      %17 = vector.broadcast %16 : vector<1x4xf32> to vector<2x4xf32>
      %18 = arith.addf %15, %17 : vector<2x4xf32>
      %cst_15 = arith.constant 0.000000e+00 : f32
      %19 = vector.broadcast %cst_15 : f32 to vector<2x4xf32>
      %20 = arith.maximumf %18, %19 : vector<2x4xf32>
      %c0_16 = arith.constant 0 : index
      %c0_17 = arith.constant 0 : index
      %21 = vector.load %arg5[%c0_16, %c0_17] : memref<4x64xf32, #tpu.memory_space<vmem>>, vector<4x64xf32>
      %cst_18 = arith.constant dense<0.000000e+00> : vector<2x64xf32>
      %22 = tpu.matmul %20, %21, %cst_18 {dimension_numbers = #tpu.dot_dimension_numbers<[1], [0], [0], [1], [0, 0, 1, 1], [], []>} : vector<2x4xf32>, vector<4x64xf32>, vector<2x64xf32> -> vector<2x64xf32>
      %c0_19 = arith.constant 0 : index
      %c0_20 = arith.constant 0 : index
      %23 = vector.load %arg6[%c0_19, %c0_20] : memref<1x64xf32, #tpu.memory_space<vmem>>, vector<1x64xf32>
      %24 = vector.broadcast %23 : vector<1x64xf32> to vector<2x64xf32>
      %25 = arith.addf %22, %24 : vector<2x64xf32>
      %26 = arith.negf %25 : vector<2x64xf32>
      %27 = math.exp %26 : vector<2x64xf32>
      %cst_21 = arith.constant 1.000000e+00 : f32
      %28 = vector.broadcast %cst_21 : f32 to vector<2x64xf32>
      %29 = arith.addf %28, %27 : vector<2x64xf32>
      %30 = arith.divf %28, %29 : vector<2x64xf32>
      %31 = vector.shape_cast %30 : vector<2x64xf32> to vector<2x1x64xf32>
      %c0_22 = arith.constant 0 : index
      %c0_23 = arith.constant 0 : index
      %c0_24 = arith.constant 0 : index
      %32 = vector.load %arg7[%c0_22, %c0_23, %c0_24] : memref<2x1x64xf32, #tpu.memory_space<vmem>>, vector<2x1x64xf32>
      tpu.vector_store %arg7[%c0_22, %c0_23, %c0_24], %31 {strides = array<i32>} : memref<2x1x64xf32, #tpu.memory_space<vmem>>, vector<2x1x64xf32>,
    } else {
    }
    return
  }
  func.func @transform_0(%arg0: i32, %arg1: i32) -> (i32, i32, i32) {
    %c0_i32 = arith.constant 0 : i32
    %c0_i32_0 = arith.constant 0 : i32
    return %arg0, %c0_i32, %arg1 : i32, i32, i32
  }
  func.func @transform_1(%arg0: i32, %arg1: i32) -> (i32, i32) {
    %c0_i32 = arith.constant 0 : i32
    %c0_i32_0 = arith.constant 0 : i32
    %c0_i32_1 = arith.constant 0 : i32
    return %c0_i32, %c0_i32_0 : i32, i32
  }
  func.func @transform_2(%arg0: i32, %arg1: i32) -> (i32, i32) {
    %c0_i32 = arith.constant 0 : i32
    %c0_i32_0 = arith.constant 0 : i32
    %c0_i32_1 = arith.constant 0 : i32
    return %c0_i32, %c0_i32_0 : i32, i32
  }
  func.func @transform_3(%arg0: i32, %arg1: i32) -> (i32, i32) {
    %c0_i32 = arith.constant 0 : i32
    %c0_i32_0 = arith.constant 0 : i32
    %c0_i32_1 = arith.constant 0 : i32
    return %c0_i32, %c0_i32_0 : i32, i32
  }
  func.func @transform_4(%arg0: i32, %arg1: i32) -> (i32, i32) {
    %c0_i32 = arith.constant 0 : i32
    %c0_i32_0 = arith.constant 0 : i32
    %c0_i32_1 = arith.constant 0 : i32
    return %c0_i32, %c0_i32_0 : i32, i32
  }
  func.func @transform_5(%arg0: i32, %arg1: i32) -> (i32, i32, i32) {
    %c0_i32 = arith.constant 0 : i32
    %c0_i32_0 = arith.constant 0 : i32
    %c0_i32_1 = arith.constant 0 : i32
    return %arg0, %c0_i32, %c0_i32_0 : i32, i32, i32
  }
}

</mosaic_0001>

<llo_original>
// kernel: tpu_custom_call.1
$region0: #{tpu_custom_call.1}
  #allocation0 [shape = 'u32[]', space=smem, size = 0x4, offset = 0x4, fixed_abs, tag = 'smem constant byte address 0x4 - core index']
  #allocation1 [shape = 'u32[144,128]{1,0:T(1,128)}', space=vmem, size = 0x12000, scoped, tag = 'internal scratch']
  #allocation2 [shape = 'f32[2,64,128]{2,1,0:T(8,128)}', space=vmem, size = 0x10000, scoped, tag = 'scratch operand']
  %s0 = inlined_call_operand.hbm [shape: f32[2,64,256], index: 0, kind: input, shape index: {}]
  %s1 = inlined_call_operand.vmem [shape: f32[64,4], index: 1, kind: input, shape index: {}]
  %s2 = inlined_call_operand.vmem [shape: f32[1,4], index: 2, kind: input, shape index: {}]
  %s3 = inlined_call_operand.vmem [shape: f32[4,64], index: 3, kind: input, shape index: {}]
  %s4 = inlined_call_operand.vmem [shape: f32[1,64], index: 4, kind: input, shape index: {}]
  %s5 = inlined_call_operand.hbm [shape: f32[2,1,64], index: 5, kind: output, shape index: {}]
  %s6 = sld [smem:[#allocation0]]
  $region69: #{tpu_custom_call.1} parent=0
    _
  %s8 = ssub.s32 1, %s6
  %s9 = scalar_select 0, %s8, %s6
  $region1: #{tpu_custom_call.1} parent=0
    #allocation3 [shape = 'u8[131072]{0}', space=vmem, size = 0x20000, scoped, tag = 'input window, operand 0']
    #allocation4 [shape = 's32[2]{0}', space=sflag, size = 0x8, scoped, tag = 'scoped memory for tpu_custom_call.1']
    #allocation5 [shape = 's32[2]{0}', space=sflag, size = 0x8, scoped, tag = 'scoped memory for tpu_custom_call.1']
    #allocation6 [shape = 'u8[1024]{0}', space=vmem, size = 0x400, scoped, tag = 'output window, operand 0, single buffered']
    %10 = vsyncpa [#allocation4], 0
    %s11 = scalar_lea.sflag [#allocation4], 1
    %12 = vsyncpa %s11, 0
    %13 = vsyncpa [#allocation5], 0
    loop: start=0, step=1, limit=4
    $region2: #{tpu_custom_call.1} parent=1 // loop_pre_header
      _
    $region3: #{tpu_custom_call.1} parent=1 // loop_header
      %s15 = sphi 0, %s19
      %p16 = scmp.ge.s32.totalorder %s15, 4
      %s22 = sphi 0, %s34
      %s23 = sphi 0, %s30
      %s24 = sphi 0, %s22
      %s25 = sphi 0, %s23
      %s26 = sphi 0, %s24
      %s27 = sphi 0, %s25
      %s39 = sphi 0, %s41
      %s42 = sphi 0, %s39
      %s43 = sphi 0, %s42
      %s59 = sphi 0, %s43
      %s63 = sphi 0, %s63
      %s65 = sphi 0, %s63
      %s66 = sphi 0, %s65
      %s80 = sphi 0, %s66
      %s84 = sphi 0, %s84
      %s86 = sphi 0, %s84
      %s87 = sphi 0, %s86
      %s101 = sphi 0, %s87
      %s105 = sphi 0, %s105
      %s107 = sphi 0, %s105
      %s108 = sphi 0, %s107
      %s122 = sphi 0, %s108
      %s126 = sphi 0, %s126
      %s128 = sphi 0, %s126
      %s129 = sphi 0, %s128
      %s143 = sphi 0, %s129
      %s149 = sphi 0, %s151
      %s152 = sphi 0, %s149
      %s153 = sphi 0, %s152
      %s169 = sphi 0, %s153
    $region4: #{tpu_custom_call.1} parent=1 // loop_header_branch
      %18 = sbr.rel (%p16) target = $region8
    $region5: #{tpu_custom_call.1} parent=1 // loop_body
      %s20 = ssub.s32 %s15, 1
      %s21 = ssub.s32 %s15, 2
      %s28 = sadd.s32 1, %s23
      %p29 = scmp.ge.s32.totalorder %s28, 2
      %s30 = scalar_select %p29, 0, %s28
      %s31 = sadd.s32 1, %s22
      %s32 = scalar_select %p29, %s31, %s22
      %p33 = scmp.ge.s32.totalorder %s32, 1
      %s34 = scalar_select %p33, 0, %s32
      %s35 = ssub.s32 %s22, %s34
      %s36 = ssub.s32 %s23, %s30
      %s37 = sor.u32 %s35, %s36
      %p38 = scmp.eq.s32.totalorder %s37, 0
      %s40 = sadd.s32 %s39, 1
      %s41 = scalar_select %p38, %s39, %s40
      %p44 = pneg %p38
      %p45 = scmp.eq.s32.totalorder %s15, 1
      %p46 = por %p44, %p45
      %p47 = scmp.ne.s32.totalorder %s39, %s42
      %p48 = scmp.eq.s32.totalorder %s15, 0
      %p49 = por %p47, %p48
      %p50 = scmp.ne.s32.totalorder %s39, %s42
      %p51 = scmp.eq.s32.totalorder %s20, 1
      %p52 = por %p50, %p51
      %p53 = scmp.ne.s32.totalorder %s42, %s43
      %p54 = scmp.eq.s32.totalorder %s20, 0
      %p55 = por %p53, %p54
      %p56 = scmp.ne.s32.totalorder %s42, %s43
      %p57 = scmp.eq.s32.totalorder %s21, 1
      %p58 = por %p56, %p57
      %p60 = scmp.ne.s32.totalorder %s43, %s59
      %p61 = scmp.eq.s32.totalorder %s21, 0
      %p62 = por %p60, %p61
      %s64 = sadd.s32 %s63, 1
      %p67 = scmp.eq.s32.totalorder %s15, 1
      %p68 = scmp.ne.s32.totalorder %s63, %s65
      %p69 = scmp.eq.s32.totalorder %s15, 0
      %p70 = por %p68, %p69
      %p71 = scmp.ne.s32.totalorder %s63, %s65
      %p72 = scmp.eq.s32.totalorder %s20, 1
      %p73 = por %p71, %p72
      %p74 = scmp.ne.s32.totalorder %s65, %s66
      %p75 = scmp.eq.s32.totalorder %s20, 0
      %p76 = por %p74, %p75
      %p77 = scmp.ne.s32.totalorder %s65, %s66
      %p78 = scmp.eq.s32.totalorder %s21, 1
      %p79 = por %p77, %p78
      %p81 = scmp.ne.s32.totalorder %s66, %s80
      %p82 = scmp.eq.s32.totalorder %s21, 0
      %p83 = por %p81, %p82
      %s85 = sadd.s32 %s84, 1
      %p88 = scmp.eq.s32.totalorder %s15, 1
      %p89 = scmp.ne.s32.totalorder %s84, %s86
      %p90 = scmp.eq.s32.totalorder %s15, 0
      %p91 = por %p89, %p90
      %p92 = scmp.ne.s32.totalorder %s84, %s86
      %p93 = scmp.eq.s32.totalorder %s20, 1
      %p94 = por %p92, %p93
      %p95 = scmp.ne.s32.totalorder %s86, %s87
      %p96 = scmp.eq.s32.totalorder %s20, 0
      %p97 = por %p95, %p96
      %p98 = scmp.ne.s32.totalorder %s86, %s87
      %p99 = scmp.eq.s32.totalorder %s21, 1
      %p100 = por %p98, %p99
      %p102 = scmp.ne.s32.totalorder %s87, %s101
      %p103 = scmp.eq.s32.totalorder %s21, 0
      %p104 = por %p102, %p103
      %s106 = sadd.s32 %s105, 1
      %p109 = scmp.eq.s32.totalorder %s15, 1
      %p110 = scmp.ne.s32.totalorder %s105, %s107
      %p111 = scmp.eq.s32.totalorder %s15, 0
      %p112 = por %p110, %p111
      %p113 = scmp.ne.s32.totalorder %s105, %s107
      %p114 = scmp.eq.s32.totalorder %s20, 1
      %p115 = por %p113, %p114
      %p116 = scmp.ne.s32.totalorder %s107, %s108
      %p117 = scmp.eq.s32.totalorder %s20, 0
      %p118 = por %p116, %p117
      %p119 = scmp.ne.s32.totalorder %s107, %s108
      %p120 = scmp.eq.s32.totalorder %s21, 1
      %p121 = por %p119, %p120
      %p123 = scmp.ne.s32.totalorder %s108, %s122
      %p124 = scmp.eq.s32.totalorder %s21, 0
      %p125 = por %p123, %p124
      %s127 = sadd.s32 %s126, 1
      %p130 = scmp.eq.s32.totalorder %s15, 1
      %p131 = scmp.ne.s32.totalorder %s126, %s128
      %p132 = scmp.eq.s32.totalorder %s15, 0
      %p133 = por %p131, %p132
      %p134 = scmp.ne.s32.totalorder %s126, %s128
      %p135 = scmp.eq.s32.totalorder %s20, 1
      %p136 = por %p134, %p135
      %p137 = scmp.ne.s32.totalorder %s128, %s129
      %p138 = scmp.eq.s32.totalorder %s20, 0
      %p139 = por %p137, %p138
      %p140 = scmp.ne.s32.totalorder %s128, %s129
      %p141 = scmp.eq.s32.totalorder %s21, 1
      %p142 = por %p140, %p141
      %p144 = scmp.ne.s32.totalorder %s129, %s143
      %p145 = scmp.eq.s32.totalorder %s21, 0
      %p146 = por %p144, %p145
      %s147 = ssub.s32 %s22, %s34
      %p148 = scmp.eq.s32.totalorder %s147, 0
      %s150 = sadd.s32 %s149, 1
      %s151 = scalar_select %p148, %s149, %s150
      %p154 = pneg %p148
      %p155 = scmp.eq.s32.totalorder %s15, 1
      %p156 = por %p154, %p155
      %p157 = scmp.ne.s32.totalorder %s149, %s152
      %p158 = scmp.eq.s32.totalorder %s15, 0
      %p159 = por %p157, %p158
      %p160 = scmp.ne.s32.totalorder %s149, %s152
      %p161 = scmp.eq.s32.totalorder %s20, 1
      %p162 = por %p160, %p161
      %p163 = scmp.ne.s32.totalorder %s152, %s153
      %p164 = scmp.eq.s32.totalorder %s20, 0
      %p165 = por %p163, %p164
      %p166 = scmp.ne.s32.totalorder %s152, %s153
      %p167 = scmp.eq.s32.totalorder %s21, 1
      %p168 = por %p166, %p167
      %p170 = scmp.ne.s32.totalorder %s153, %s169
      %p171 = scmp.eq.s32.totalorder %s21, 0
      %p172 = por %p170, %p171
      %p173 = scmp.le.s32.totalorder 1, %s15
      %p174 = scmp.lt.s32.totalorder %s15, 3
      %p175 = pnand %p173, %p174
      %p176 = pneg %p175
      // Predicated region
      $region9: #{tpu_custom_call.1} parent=5 // pred_check
        _
      $region10: #{tpu_custom_call.1} parent=5 // pred_check_branch
        %178 = sbr.rel (%p175) target = $region12
      $region11: #{tpu_custom_call.1} parent=5 // pred_region
        %s179 = ssub.s32 %s15, 1
        // Predicated region
        $region13: #{tpu_custom_call.1} parent=11 // pred_check
          %p180 = pneg %p76
        $region14: #{tpu_custom_call.1} parent=11 // pred_check_branch
          %182 = sbr.rel (%p180) target = $region16
        $region15: #{tpu_custom_call.1} parent=11 // pred_region
          _
        $region16: #{tpu_custom_call.1} parent=11 // pred_fallthru
          _
        // Predicated region
        $region17: #{tpu_custom_call.1} parent=11 // pred_check
          %p183 = pneg %p97
        $region18: #{tpu_custom_call.1} parent=11 // pred_check_branch
          %185 = sbr.rel (%p183) target = $region20
        $region19: #{tpu_custom_call.1} parent=11 // pred_region
          _
        $region20: #{tpu_custom_call.1} parent=11 // pred_fallthru
          _
        // Predicated region
        $region21: #{tpu_custom_call.1} parent=11 // pred_check
          %p186 = pneg %p118
        $region22: #{tpu_custom_call.1} parent=11 // pred_check_branch
          %188 = sbr.rel (%p186) target = $region24
        $region23: #{tpu_custom_call.1} parent=11 // pred_region
          _
        $region24: #{tpu_custom_call.1} parent=11 // pred_fallthru
          _
        // Predicated region
        $region25: #{tpu_custom_call.1} parent=11 // pred_check
          %p189 = pneg %p139
        $region26: #{tpu_custom_call.1} parent=11 // pred_check_branch
          %191 = sbr.rel (%p189) target = $region28
        $region27: #{tpu_custom_call.1} parent=11 // pred_region
          _
        $region28: #{tpu_custom_call.1} parent=11 // pred_fallthru
          _
      $region12: #{tpu_custom_call.1} parent=5 // pred_fallthru
        _
      %p192 = scmp.lt.s32.totalorder %s15, 2
      // Predicated region
      $region29: #{tpu_custom_call.1} parent=5 // pred_check
        %p193 = pneg %p192
      $region30: #{tpu_custom_call.1} parent=5 // pred_check_branch
        %195 = sbr.rel (%p193) target = $region32
      $region31: #{tpu_custom_call.1} parent=5 // pred_region
        // Predicated region
        $region33: #{tpu_custom_call.1} parent=31 // pred_check
          %p196 = pneg %p49
        $region34: #{tpu_custom_call.1} parent=31 // pred_check_branch
          %198 = sbr.rel (%p196) target = $region36
        $region35: #{tpu_custom_call.1} parent=31 // pred_region
          %s199 = sand.u32 %s39, 1
          %s200 = scalar_lea.sflag [#allocation4], %s199
          %s201 = sand.u32 %s39, 1
          %s202 = smul.addr %s201, 128
          %s203 = scalar_lea.vmem [#allocation3], %s202
          %s204 = smul.u32 2, %s22
          %s206 = ssub.s32 2048, 2048
          %207 = vsyncadd %s200, %s206
          %s208 = smul.addr %s204, 16
          %s209 = sadd.s32 %s23, %s208
          %s210 = smul.addr %s209, 128
          %s211 = scalar_lea.hbm %s0, %s210
          %s212 = sshll.u32 %s203, 4
          %s213 = int_to_ptr.vmem [resolvable:$true] %s212
          %218 = dma.hbm_to_vmem [thread:$0]  %s211, 2048, %s213, %s200, 256, 128, 8
        $region36: #{tpu_custom_call.1} parent=31 // pred_fallthru
          _
      $region32: #{tpu_custom_call.1} parent=5 // pred_fallthru
        _
      %p219 = scmp.le.s32.totalorder 1, %s15
      %p220 = scmp.lt.s32.totalorder %s15, 3
      %p221 = pnand %p219, %p220
      %p222 = pneg %p221
      // Predicated region
      $region37: #{tpu_custom_call.1} parent=5 // pred_check
        _
      $region38: #{tpu_custom_call.1} parent=5 // pred_check_branch
        %224 = sbr.rel (%p221) target = $region40
      $region39: #{tpu_custom_call.1} parent=5 // pred_region
        %s225 = ssub.s32 %s15, 1
        %s226 = sand.u32 %s42, 1
        %s227 = scalar_lea.sflag [#allocation4], %s226
        %s228 = sand.u32 %s42, 1
        %s229 = smul.addr %s228, 128
        %s230 = scalar_lea.vmem [#allocation3], %s229
        // Predicated region
        $region41: #{tpu_custom_call.1} parent=39 // pred_check
          %p231 = pneg %p55
        $region42: #{tpu_custom_call.1} parent=39 // pred_check_branch
          %233 = sbr.rel (%p231) target = $region44
        $region43: #{tpu_custom_call.1} parent=39 // pred_region
          %234 = dma.done %s227, 2048
        $region44: #{tpu_custom_call.1} parent=39 // pred_fallthru
          _
        %s235 = sand.u32 %s42, 1
        %s236 = scalar_lea.sflag [#allocation4], %s235
        %s237 = sand.u32 %s42, 1
        %s238 = smul.addr %s237, 128
        %s239 = scalar_lea.vmem [#allocation3], %s238
        %p240 = pneg %p55
        %p241 = pneg %p52
        %p242 = pneg %p76
        %p243 = pneg %p73
        %p244 = pneg %p97
        %p245 = pneg %p94
        %p246 = pneg %p118
        %p247 = pneg %p115
        %p248 = pneg %p139
        %p249 = pneg %p136
        %p250 = pneg %p165
        %p251 = pneg %p162
        %s252 = smul.u32 2, %s24
        %s253 = smul.u32 2, %s24
        %v254 = vld [vmem:[%s230] sm:$0xff]
        %v255 = vld [vmem:[%s230 + $0x8] sm:$0xff]
        %v256 = vld [vmem:[%s230 + $0x10] sm:$0xff]
        %v257 = vld [vmem:[%s230 + $0x18] sm:$0xff]
        %v258 = vld [vmem:[%s230 + $0x20] sm:$0xff]
        %v259 = vld [vmem:[%s230 + $0x28] sm:$0xff]
        %v260 = vld [vmem:[%s230 + $0x30] sm:$0xff]
        %v261 = vld [vmem:[%s230 + $0x38] sm:$0xff]
        %v262 = vld [vmem:[%s230 + $0x40] sm:$0xff]
        %v263 = vld [vmem:[%s230 + $0x48] sm:$0xff]
        %v264 = vld [vmem:[%s230 + $0x50] sm:$0xff]
        %v265 = vld [vmem:[%s230 + $0x58] sm:$0xff]
        %v266 = vld [vmem:[%s230 + $0x60] sm:$0xff]
        %v267 = vld [vmem:[%s230 + $0x68] sm:$0xff]
        %v268 = vld [vmem:[%s230 + $0x70] sm:$0xff]
        %v269 = vld [vmem:[%s230 + $0x78] sm:$0xff]
        %p270 = scmp.eq.s32.totalorder %s25, 0
        // Predicated region
        $region45: #{tpu_custom_call.1} parent=39 // pred_check
          %p271 = pneg %p270
        $region46: #{tpu_custom_call.1} parent=39 // pred_check_branch
          %273 = sbr.rel (%p271) target = $region48
        $region47: #{tpu_custom_call.1} parent=39 // pred_region
          %274 = vst [vmem:[#allocation2] sm:$0xff] %v254
          %275 = vst [vmem:[#allocation2 + $0x8] sm:$0xff] %v255
          %276 = vst [vmem:[#allocation2 + $0x10] sm:$0xff] %v256
          %277 = vst [vmem:[#allocation2 + $0x18] sm:$0xff] %v257
          %278 = vst [vmem:[#allocation2 + $0x20] sm:$0xff] %v258
          %279 = vst [vmem:[#allocation2 + $0x28] sm:$0xff] %v259
          %280 = vst [vmem:[#allocation2 + $0x30] sm:$0xff] %v260
          %281 = vst [vmem:[#allocation2 + $0x38] sm:$0xff] %v261
          %282 = vst [vmem:[#allocation2 + $0x40] sm:$0xff] %v262
          %283 = vst [vmem:[#allocation2 + $0x48] sm:$0xff] %v263
          %284 = vst [vmem:[#allocation2 + $0x50] sm:$0xff] %v264
          %285 = vst [vmem:[#allocation2 + $0x58] sm:$0xff] %v265
          %286 = vst [vmem:[#allocation2 + $0x60] sm:$0xff] %v266
          %287 = vst [vmem:[#allocation2 + $0x68] sm:$0xff] %v267
          %288 = vst [vmem:[#allocation2 + $0x70] sm:$0xff] %v268
          %289 = vst [vmem:[#allocation2 + $0x78] sm:$0xff] %v269
        $region48: #{tpu_custom_call.1} parent=39 // pred_fallthru
          _
        %p290 = scmp.gt.s32.totalorder %s25, 0
        // Predicated region
        $region49: #{tpu_custom_call.1} parent=39 // pred_check
          %p291 = pneg %p290
        $region50: #{tpu_custom_call.1} parent=39 // pred_check_branch
          %293 = sbr.rel (%p291) target = $region52
        $region51: #{tpu_custom_call.1} parent=39 // pred_region
          %v294 = vld [vmem:[#allocation2] sm:$0xff]
          %v295 = vld [vmem:[#allocation2 + $0x8] sm:$0xff]
          %v296 = vld [vmem:[#allocation2 + $0x10] sm:$0xff]
          %v297 = vld [vmem:[#allocation2 + $0x18] sm:$0xff]
          %v298 = vld [vmem:[#allocation2 + $0x20] sm:$0xff]
          %v299 = vld [vmem:[#allocation2 + $0x28] sm:$0xff]
          %v300 = vld [vmem:[#allocation2 + $0x30] sm:$0xff]
          %v301 = vld [vmem:[#allocation2 + $0x38] sm:$0xff]
          %v302 = vld [vmem:[#allocation2 + $0x40] sm:$0xff]
          %v303 = vld [vmem:[#allocation2 + $0x48] sm:$0xff]
          %v304 = vld [vmem:[#allocation2 + $0x50] sm:$0xff]
          %v305 = vld [vmem:[#allocation2 + $0x58] sm:$0xff]
          %v306 = vld [vmem:[#allocation2 + $0x60] sm:$0xff]
          %v307 = vld [vmem:[#allocation2 + $0x68] sm:$0xff]
          %v308 = vld [vmem:[#allocation2 + $0x70] sm:$0xff]
          %v309 = vld [vmem:[#allocation2 + $0x78] sm:$0xff]
          %v310 = vadd.f32 %v294, %v254
          %v311 = vadd.f32 %v295, %v255
          %v312 = vadd.f32 %v296, %v256
          %v313 = vadd.f32 %v297, %v257
          %v314 = vadd.f32 %v298, %v258
          %v315 = vadd.f32 %v299, %v259
          %v316 = vadd.f32 %v300, %v260
          %v317 = vadd.f32 %v301, %v261
          %v318 = vadd.f32 %v302, %v262
          %v319 = vadd.f32 %v303, %v263
          %v320 = vadd.f32 %v304, %v264
          %v321 = vadd.f32 %v305, %v265
          %v322 = vadd.f32 %v306, %v266
          %v323 = vadd.f32 %v307, %v267
          %v324 = vadd.f32 %v308, %v268
          %v325 = vadd.f32 %v309, %v269
          %326 = vst [vmem:[#allocation2] sm:$0xff] %v310
          %327 = vst [vmem:[#allocation2 + $0x8] sm:$0xff] %v311
          %328 = vst [vmem:[#allocation2 + $0x10] sm:$0xff] %v312
          %329 = vst [vmem:[#allocation2 + $0x18] sm:$0xff] %v313
          %330 = vst [vmem:[#allocation2 + $0x20] sm:$0xff] %v314
          %331 = vst [vmem:[#allocation2 + $0x28] sm:$0xff] %v315
          %332 = vst [vmem:[#allocation2 + $0x30] sm:$0xff] %v316
          %333 = vst [vmem:[#allocation2 + $0x38] sm:$0xff] %v317
          %334 = vst [vmem:[#allocation2 + $0x40] sm:$0xff] %v318
          %335 = vst [vmem:[#allocation2 + $0x48] sm:$0xff] %v319
          %336 = vst [vmem:[#allocation2 + $0x50] sm:$0xff] %v320
          %337 = vst [vmem:[#allocation2 + $0x58] sm:$0xff] %v321
          %338 = vst [vmem:[#allocation2 + $0x60] sm:$0xff] %v322
          %339 = vst [vmem:[#allocation2 + $0x68] sm:$0xff] %v323
          %340 = vst [vmem:[#allocation2 + $0x70] sm:$0xff] %v324
          %341 = vst [vmem:[#allocation2 + $0x78] sm:$0xff] %v325
        $region52: #{tpu_custom_call.1} parent=39 // pred_fallthru
          _
        %p342 = scmp.eq.s32.totalorder %s25, 1
        // Predicated region
        $region53: #{tpu_custom_call.1} parent=39 // pred_check
          %p343 = pneg %p342
        $region54: #{tpu_custom_call.1} parent=39 // pred_check_branch
          %345 = sbr.rel (%p343) target = $region56
        $region55: #{tpu_custom_call.1} parent=39 // pred_region
          %v346 = vld [vmem:[#allocation2] sm:$0xff]
          %v347 = vld [vmem:[#allocation2 + $0x8] sm:$0xff]
          %v348 = vld [vmem:[#allocation2 + $0x10] sm:$0xff]
          %v349 = vld [vmem:[#allocation2 + $0x18] sm:$0xff]
          %v350 = vld [vmem:[#allocation2 + $0x20] sm:$0xff]
          %v351 = vld [vmem:[#allocation2 + $0x28] sm:$0xff]
          %v352 = vld [vmem:[#allocation2 + $0x30] sm:$0xff]
          %v353 = vld [vmem:[#allocation2 + $0x38] sm:$0xff]
          %v354 = vld [vmem:[#allocation2 + $0x40] sm:$0xff]
          %v355 = vld [vmem:[#allocation2 + $0x48] sm:$0xff]
          %v356 = vld [vmem:[#allocation2 + $0x50] sm:$0xff]
          %v357 = vld [vmem:[#allocation2 + $0x58] sm:$0xff]
          %v358 = vld [vmem:[#allocation2 + $0x60] sm:$0xff]
          %v359 = vld [vmem:[#allocation2 + $0x68] sm:$0xff]
          %v360 = vld [vmem:[#allocation2 + $0x70] sm:$0xff]
          %v361 = vld [vmem:[#allocation2 + $0x78] sm:$0xff]
          %362 = vadd.xlane.f32.xlu0 %v346
          %v363 = vpop.xlane.xlu0 %362
          %364 = vadd.xlane.f32.xlu0 %v347
          %v365 = vpop.xlane.xlu0 %364
          %366 = vadd.xlane.f32.xlu0 %v348
          %v367 = vpop.xlane.xlu0 %366
          %368 = vadd.xlane.f32.xlu0 %v349
          %v369 = vpop.xlane.xlu0 %368
          %370 = vadd.xlane.f32.xlu0 %v350
          %v371 = vpop.xlane.xlu0 %370
          %372 = vadd.xlane.f32.xlu0 %v351
          %v373 = vpop.xlane.xlu0 %372
          %374 = vadd.xlane.f32.xlu0 %v352
          %v375 = vpop.xlane.xlu0 %374
          %376 = vadd.xlane.f32.xlu0 %v353
          %v377 = vpop.xlane.xlu0 %376
          %378 = vadd.xlane.f32.xlu0 %v354
          %v379 = vpop.xlane.xlu0 %378
          %380 = vadd.xlane.f32.xlu0 %v355
          %v381 = vpop.xlane.xlu0 %380
          %382 = vadd.xlane.f32.xlu0 %v356
          %v383 = vpop.xlane.xlu0 %382
          %384 = vadd.xlane.f32.xlu0 %v357
          %v385 = vpop.xlane.xlu0 %384
          %386 = vadd.xlane.f32.xlu0 %v358
          %v387 = vpop.xlane.xlu0 %386
          %388 = vadd.xlane.f32.xlu0 %v359
          %v389 = vpop.xlane.xlu0 %388
          %390 = vadd.xlane.f32.xlu0 %v360
          %v391 = vpop.xlane.xlu0 %390
          %392 = vadd.xlane.f32.xlu0 %v361
          %v393 = vpop.xlane.xlu0 %392
          %v394 = vmul.f32 %v363, 0.00390625
          %v395 = vmul.f32 %v365, 0.00390625
          %v396 = vmul.f32 %v367, 0.00390625
          %v397 = vmul.f32 %v369, 0.00390625
          %v398 = vmul.f32 %v371, 0.00390625
          %v399 = vmul.f32 %v373, 0.00390625
          %v400 = vmul.f32 %v375, 0.00390625
          %v401 = vmul.f32 %v377, 0.00390625
          %v402 = vmul.f32 %v379, 0.00390625
          %v403 = vmul.f32 %v381, 0.00390625
          %v404 = vmul.f32 %v383, 0.00390625
          %v405 = vmul.f32 %v385, 0.00390625
          %v406 = vmul.f32 %v387, 0.00390625
          %v407 = vmul.f32 %v389, 0.00390625
          %v408 = vmul.f32 %v391, 0.00390625
          %v409 = vmul.f32 %v393, 0.00390625
          %v410 = vld [vmem:[%s1] sm:$0xff]
          %v411 = vld [vmem:[%s1 + $0x8] sm:$0xff]
          %v412 = vld [vmem:[%s1 + $0x10] sm:$0xff]
          %v413 = vld [vmem:[%s1 + $0x18] sm:$0xff]
          %v414 = vld [vmem:[%s1 + $0x20] sm:$0xff]
          %v415 = vld [vmem:[%s1 + $0x28] sm:$0xff]
          %v416 = vld [vmem:[%s1 + $0x30] sm:$0xff]
          %v417 = vld [vmem:[%s1 + $0x38] sm:$0xff]
          %v418 = vld [vmem:[%s2] sm:$0x1]
          %v420 = vlaneseq
          %v421 = vshrl.u32 %v420, 7
          %v422 = vsub.s32 0, %v421
          %v423 = vrot.slane %v418, %v422
          %v441 = vlaneseq
          %v442 = vand.u32 %v441, 127
          %v443 = vlaneseq
          %v444 = vshrl.u32 %v443, 7
          %v445 = vsub.s32 %v442, %v444
          %v446 = vrot.slane %v394, %v445
          %v447 = vadd.s32 %v442, 4294967288
          %v448 = vlaneseq
          %v449 = vshrl.u32 %v448, 7
          %v450 = vsub.s32 %v447, %v449
          %v451 = vrot.slane %v395, %v450
          %vm452 = vcmask 130112
          %v453 = vsel %vm452, %v451, %v446
          %v454 = vadd.s32 %v442, 4294967280
          %v455 = vlaneseq
          %v456 = vshrl.u32 %v455, 7
          %v457 = vsub.s32 %v454, %v456
          %v458 = vrot.slane %v396, %v457
          %vm459 = vcmask 195712
          %v460 = vsel %vm459, %v458, %v453
          %v461 = vadd.s32 %v442, 4294967272
          %v462 = vlaneseq
          %v463 = vshrl.u32 %v462, 7
          %v464 = vsub.s32 %v461, %v463
          %v465 = vrot.slane %v397, %v464
          %vm466 = vcmask 261312
          %v467 = vsel %vm466, %v465, %v460
          %v468 = vadd.s32 %v442, 4294967264
          %v469 = vlaneseq
          %v470 = vshrl.u32 %v469, 7
          %v471 = vsub.s32 %v468, %v470
          %v472 = vrot.slane %v398, %v471
          %vm473 = vcmask 326912
          %v474 = vsel %vm473, %v472, %v467
          %v475 = vadd.s32 %v442, 4294967256
          %v476 = vlaneseq
          %v477 = vshrl.u32 %v476, 7
          %v478 = vsub.s32 %v475, %v477
          %v479 = vrot.slane %v399, %v478
          %vm480 = vcmask 392512
          %v481 = vsel %vm480, %v479, %v474
          %v482 = vadd.s32 %v442, 4294967248
          %v483 = vlaneseq
          %v484 = vshrl.u32 %v483, 7
          %v485 = vsub.s32 %v482, %v484
          %v486 = vrot.slane %v400, %v485
          %vm487 = vcmask 458112
          %v488 = vsel %vm487, %v486, %v481
          %v489 = vadd.s32 %v442, 4294967240
          %v490 = vlaneseq
          %v491 = vshrl.u32 %v490, 7
          %v492 = vsub.s32 %v489, %v491
          %v493 = vrot.slane %v401, %v492
          %vm494 = vcmask 523712
          %v495 = vsel %vm494, %v493, %v488
          %v496 = vlaneseq
          %v497 = vshrl.u32 %v496, 7
          %v498 = vsub.s32 %v442, %v497
          %v499 = vrot.slane %v402, %v498
          %v500 = vlaneseq
          %v501 = vshrl.u32 %v500, 7
          %v502 = vsub.s32 %v447, %v501
          %v503 = vrot.slane %v403, %v502
          %v504 = vsel %vm452, %v503, %v499
          %v505 = vlaneseq
          %v506 = vshrl.u32 %v505, 7
          %v507 = vsub.s32 %v454, %v506
          %v508 = vrot.slane %v404, %v507
          %v509 = vsel %vm459, %v508, %v504
          %v510 = vlaneseq
          %v511 = vshrl.u32 %v510, 7
          %v512 = vsub.s32 %v461, %v511
          %v513 = vrot.slane %v405, %v512
          %v514 = vsel %vm466, %v513, %v509
          %v515 = vlaneseq
          %v516 = vshrl.u32 %v515, 7
          %v517 = vsub.s32 %v468, %v516
          %v518 = vrot.slane %v406, %v517
          %v519 = vsel %vm473, %v518, %v514
          %v520 = vlaneseq
          %v521 = vshrl.u32 %v520, 7
          %v522 = vsub.s32 %v475, %v521
          %v523 = vrot.slane %v407, %v522
          %v524 = vsel %vm480, %v523, %v519
          %v525 = vlaneseq
          %v526 = vshrl.u32 %v525, 7
          %v527 = vsub.s32 %v482, %v526
          %v528 = vrot.slane %v408, %v527
          %v529 = vsel %vm487, %v528, %v524
          %v530 = vlaneseq
          %v531 = vshrl.u32 %v530, 7
          %v532 = vsub.s32 %v489, %v531
          %v533 = vrot.slane %v409, %v532
          %v534 = vsel %vm494, %v533, %v529
          %vm535 = vcmask 1041409
          %v536 = vsel %vm535, %v534, %v495
          %vm537 = vcmask 523264
          %v538 = vsel %vm537, %v536, 0
          %540 = vmatprep.subr.mxu0 0.0
          %541 = vmatpush1.msra.mxu0 %v410
          %542 = vmatprep.subr.mxu0 0.0
          %543 = vmatpush1.msra.mxu0 %v411
          %544 = vmatprep.subr.mxu0 0.0
          %545 = vmatpush1.msra.mxu0 %v412
          %546 = vmatprep.subr.mxu0 0.0
          %547 = vmatpush1.msra.mxu0 %v413
          %548 = vmatprep.subr.mxu0 0.0
          %549 = vmatpush1.msra.mxu0 %v414
          %550 = vmatprep.subr.mxu0 0.0
          %551 = vmatpush1.msra.mxu0 %v415
          %552 = vmatprep.subr.mxu0 0.0
          %553 = vmatpush1.msra.mxu0 %v416
          %554 = vmatprep.subr.mxu0 0.0
          %555 = vmatpush1.msra.mxu0 %v417
          %556 = vmatprep.subr.mxu0 0.0
          %557 = vmatpush1.msra.mxu0 0.0
          %558 = vmatprep.subr.mxu0 0.0
          %559 = vmatpush1.msra.mxu0 0.0
          %560 = vmatprep.subr.mxu0 0.0
          %561 = vmatpush1.msra.mxu0 0.0
          %562 = vmatprep.subr.mxu0 0.0
          %563 = vmatpush1.msra.mxu0 0.0
          %564 = vmatprep.subr.mxu0 0.0
          %565 = vmatpush1.msra.mxu0 0.0
          %566 = vmatprep.subr.mxu0 0.0
          %567 = vmatpush1.msra.mxu0 0.0
          %568 = vmatprep.subr.mxu0 0.0
          %569 = vmatpush1.msra.mxu0 0.0
          %570 = vmatprep.subr.mxu0 0.0
          %571 = vmatpush1.msra.mxu0 0.0
          %572 = vmatprep.subr.mxu0 0.0
          %573 = vmatpush1.msra.mxu0 0.0
          %574 = vmatprep.subr.mxu0 0.0
          %575 = vmatpush1.msra.mxu0 0.0
          %576 = vmatprep.subr.mxu0 0.0
          %577 = vmatpush1.msra.mxu0 0.0
          %578 = vmatprep.subr.mxu0 0.0
          %579 = vmatpush1.msra.mxu0 0.0
          %580 = vmatprep.subr.mxu0 0.0
          %581 = vmatpush1.msra.mxu0 0.0
          %582 = vmatprep.subr.mxu0 0.0
          %583 = vmatpush1.msra.mxu0 0.0
          %584 = vmatprep.subr.mxu0 0.0
          %585 = vmatpush1.msra.mxu0 0.0
          %586 = vmatprep.subr.mxu0 0.0
          %587 = vmatpush1.msra.mxu0 0.0
          %588 = vmatprep.subr.mxu0 0.0
          %589 = vmatpush1.msra.mxu0 0.0
          %590 = vmatprep.subr.mxu0 0.0
          %591 = vmatpush1.msra.mxu0 0.0
          %592 = vmatprep.subr.mxu0 0.0
          %593 = vmatpush1.msra.mxu0 0.0
          %594 = vmatprep.subr.mxu0 0.0
          %595 = vmatpush1.msra.mxu0 0.0
          %596 = vmatprep.subr.mxu0 0.0
          %597 = vmatpush1.msra.mxu0 0.0
          %598 = vmatprep.subr.mxu0 0.0
          %599 = vmatpush1.msra.mxu0 0.0
          %600 = vmatprep.subr.mxu0 0.0
          %601 = vmatpush1.msra.mxu0 0.0
          %602 = vmatprep.subr.mxu0 0.0
          %603 = vmatpush1.msra.mxu0 0.0
          %604 = vmatprep.mubr.f32.mxu0 0.0
          %605 = vmatmul.mubr.f32.gmra.mrb[0].mxu0 %v538
          %v606 = vpop.f32.mrb[0].mxu0
          %v607 = vadd.f32 %v423, %v606
          %v608 = vpop.f32.mrb[0].mxu0
          %609 = vdwg.mxu0
          %v610 = vmax.f32 %v607, 0.0
          %v611 = vld [vmem:[%s3] sm:$0xf]
          %v612 = vld [vmem:[%s4] sm:$0x1]
          %v614 = vlaneseq
          %v615 = vshrl.u32 %v614, 7
          %v616 = vsub.s32 0, %v615
          %v617 = vrot.slane %v612, %v616
          %vm619 = vcmask 31744
          %v621 = vsel %vm619, %v610, 0
          %vm623 = vcmask 1043456
          %v625 = vsel %vm623, %v611, 0
          %627 = vmatprep.subr.mxu0 0.0
          %628 = vmatpush1.msra.mxu0 %v625
          %629 = vmatprep.subr.mxu0 0.0
          %630 = vmatpush1.msra.mxu0 0.0
          %631 = vmatprep.subr.mxu0 0.0
          %632 = vmatpush1.msra.mxu0 0.0
          %633 = vmatprep.subr.mxu0 0.0
          %634 = vmatpush1.msra.mxu0 0.0
          %635 = vmatprep.subr.mxu0 0.0
          %636 = vmatpush1.msra.mxu0 0.0
          %637 = vmatprep.subr.mxu0 0.0
          %638 = vmatpush1.msra.mxu0 0.0
          %639 = vmatprep.subr.mxu0 0.0
          %640 = vmatpush1.msra.mxu0 0.0
          %641 = vmatprep.subr.mxu0 0.0
          %642 = vmatpush1.msra.mxu0 0.0
          %643 = vmatprep.subr.mxu0 0.0
          %644 = vmatpush1.msra.mxu0 0.0
          %645 = vmatprep.subr.mxu0 0.0
          %646 = vmatpush1.msra.mxu0 0.0
          %647 = vmatprep.subr.mxu0 0.0
          %648 = vmatpush1.msra.mxu0 0.0
          %649 = vmatprep.subr.mxu0 0.0
          %650 = vmatpush1.msra.mxu0 0.0
          %651 = vmatprep.subr.mxu0 0.0
          %652 = vmatpush1.msra.mxu0 0.0
          %653 = vmatprep.subr.mxu0 0.0
          %654 = vmatpush1.msra.mxu0 0.0
          %655 = vmatprep.subr.mxu0 0.0
          %656 = vmatpush1.msra.mxu0 0.0
          %657 = vmatprep.subr.mxu0 0.0
          %658 = vmatpush1.msra.mxu0 0.0
          %659 = vmatprep.subr.mxu0 0.0
          %660 = vmatpush1.msra.mxu0 0.0
          %661 = vmatprep.subr.mxu0 0.0
          %662 = vmatpush1.msra.mxu0 0.0
          %663 = vmatprep.subr.mxu0 0.0
          %664 = vmatpush1.msra.mxu0 0.0
          %665 = vmatprep.subr.mxu0 0.0
          %666 = vmatpush1.msra.mxu0 0.0
          %667 = vmatprep.subr.mxu0 0.0
          %668 = vmatpush1.msra.mxu0 0.0
          %669 = vmatprep.subr.mxu0 0.0
          %670 = vmatpush1.msra.mxu0 0.0
          %671 = vmatprep.subr.mxu0 0.0
          %672 = vmatpush1.msra.mxu0 0.0
          %673 = vmatprep.subr.mxu0 0.0
          %674 = vmatpush1.msra.mxu0 0.0
          %675 = vmatprep.subr.mxu0 0.0
          %676 = vmatpush1.msra.mxu0 0.0
          %677 = vmatprep.subr.mxu0 0.0
          %678 = vmatpush1.msra.mxu0 0.0
          %679 = vmatprep.subr.mxu0 0.0
          %680 = vmatpush1.msra.mxu0 0.0
          %681 = vmatprep.subr.mxu0 0.0
          %682 = vmatpush1.msra.mxu0 0.0
          %683 = vmatprep.subr.mxu0 0.0
          %684 = vmatpush1.msra.mxu0 0.0
          %685 = vmatprep.subr.mxu0 0.0
          %686 = vmatpush1.msra.mxu0 0.0
          %687 = vmatprep.subr.mxu0 0.0
          %688 = vmatpush1.msra.mxu0 0.0
          %689 = vmatprep.subr.mxu0 0.0
          %690 = vmatpush1.msra.mxu0 0.0
          %691 = vmatprep.mubr.f32.mxu0 0.0
          %692 = vmatmul.mubr.f32.gmra.mrb[0].mxu0 %v621
          %v693 = vpop.f32.mrb[0].mxu0
          %v694 = vadd.f32 %v617, %v693
          %v695 = vpop.f32.mrb[0].mxu0
          %696 = vdwg.mxu0
          %v697 = vxor.u32 %v694, 2147483648
          %v698 = vmul.f32 %v697, 1.442695
          %v699 = vpow.pop %v698
          %v700 = vadd.f32 %v699, 1.0
          %v701 = vrcp.pop %v700
          %v702 = vmul.f32 1.0, %v701
          %v705 = vunpack.c.l.s4 1966171168
          %v706 = vunpack.c.0.s8 %v705
          %v707 = vlaneseq
          %v708 = vshrl.u32 %v707, 7
          %v709 = vsub.s32 %v706, %v708
          %v710 = vrot.slane %v702, %v709
          %v711 = vcombine.high %v710, %v710
          %v713 = vunpack.c.l.s4 1966171168
          %v714 = vunpack.c.0.s8 %v713
          %v715 = vlaneseq
          %v716 = vshrl.u32 %v715, 7
          %v717 = vsub.s32 %v714, %v716
          %v718 = vrot.slane %v710, %v717
          %v720 = vunpack.c.l.s4 1966171168
          %v721 = vunpack.c.0.s8 %v720
          %v722 = vlaneseq
          %v723 = vshrl.u32 %v722, 7
          %v724 = vsub.s32 %v721, %v723
          %v725 = vrot.slane %v711, %v724
          %vm728 = vcmask 516096
          %729 = vst.msk [vmem:[#allocation6] sm:$0x1] %vm728, %v718
          %730 = vst.msk [vmem:[#allocation6 + $0x1] sm:$0x1] %vm728, %v725
        $region56: #{tpu_custom_call.1} parent=39 // pred_fallthru
          _
        // Predicated region
        $region57: #{tpu_custom_call.1} parent=39 // pred_check
          %p731 = pneg %p162
        $region58: #{tpu_custom_call.1} parent=39 // pred_check_branch
          %733 = sbr.rel (%p731) target = $region60
        $region59: #{tpu_custom_call.1} parent=39 // pred_region
          %s734 = smul.u32 2, %s24
          %s736 = ssub.s32 32, 32
          %737 = vsyncadd [#allocation5], %s736
          %s738 = smul.addr %s734, 16
          %s739 = scalar_lea.hbm %s5, %s738
          %s740 = sshll.u32 [#allocation6], 4
          %s741 = int_to_ptr.vmem [resolvable:$true] %s740
          %746 = dma.vmem_to_hbm [thread:$0]  %s741, 32, %s739, [#allocation5], 16, 16, 1
        $region60: #{tpu_custom_call.1} parent=39 // pred_fallthru
          _
        // Predicated region
        $region61: #{tpu_custom_call.1} parent=39 // pred_check
          %p747 = pneg %p162
        $region62: #{tpu_custom_call.1} parent=39 // pred_check_branch
          %749 = sbr.rel (%p747) target = $region64
        $region63: #{tpu_custom_call.1} parent=39 // pred_region
          %750 = dma.done [#allocation5], 32
        $region64: #{tpu_custom_call.1} parent=39 // pred_fallthru
          _
      $region40: #{tpu_custom_call.1} parent=5 // pred_fallthru
        _
      %p751 = scmp.le.s32.totalorder 2, %s15
      // Predicated region
      $region65: #{tpu_custom_call.1} parent=5 // pred_check
        %p752 = pneg %p751
      $region66: #{tpu_custom_call.1} parent=5 // pred_check_branch
        %754 = sbr.rel (%p752) target = $region68
      $region67: #{tpu_custom_call.1} parent=5 // pred_region
        %s755 = ssub.s32 %s15, 2
      $region68: #{tpu_custom_call.1} parent=5 // pred_fallthru
        _
    $region6: #{tpu_custom_call.1} parent=1 // loop_footer
      %s19 = sadd.s32 1, %s15
    $region7: #{tpu_custom_call.1} parent=1 // loop_footer_branch
      %14 = sbr.rel target = $region3
    $region8: #{tpu_custom_call.1} parent=1 // loop_exit
      _
    %756 = vsyncpa [#allocation4], 1
    %s757 = scalar_lea.sflag [#allocation4], 1
    %758 = vsyncpa %s757, 1
    %759 = vsyncpa [#allocation5], 1
    %s760 = scalar_lea.sflag [#allocation5], 1
    %761 = vsyncpa %s760, 1

</llo_original>
